<compile_context>
chip_gen: v7x
topology: tpu7x:2x2x1
jax: 0.10.0
libtpu: 0.0.40
codegen_flags: <defaults>
</compile_context>

<pallas_src>
import jax
import jax.numpy as jnp
from jax import lax
from jax.experimental import pallas as pl
from jax.experimental.pallas import tpu as pltpu


def reduce_mul_kernel(x_ref, w_ref, b_ref, o_ref, acc_ref, prod_ref):
    # grid axes: 0 = M-tile (parallel), 1 = H_out-tile (parallel),
    #            2 = branch index (arbitrary), 3 = K-tile (arbitrary, innermost).
    n = pl.program_id(2)
    k = pl.program_id(3)
    n_branches = pl.num_programs(2)
    n_k = pl.num_programs(3)

    # ---- per-branch matmul, accumulated over K in f32 scratch ----------------
    @pl.when(k == 0)
    def _():
        acc_ref[...] = jnp.zeros_like(acc_ref)

    # bf16 x bf16 -> f32 on the MXU.
    acc_ref[...] += jnp.dot(
        x_ref[...], w_ref[...], preferred_element_type=jnp.float32
    )

    # ---- at the last K step: fold this branch into the running product ------
    last_k = k == n_k - 1

    @pl.when(last_k & (n == 0))
    def _():
        prod_ref[...] = acc_ref[...] + b_ref[...]

    @pl.when(last_k & (n > 0))
    def _():
        prod_ref[...] = prod_ref[...] * (acc_ref[...] + b_ref[...])

    # Write/cast the output exactly once, at the very last (branch, k) step.
    @pl.when(last_k & (n == n_branches - 1))
    def _():
        o_ref[...] = prod_ref[...].astype(o_ref.dtype)


def _round_up(x, m):
    return (x + m - 1) // m * m


def reduce_mul(
    x,
    weights,
    biases,
    *,
    tm_target=512,     # multiple of 8   (sublane axis); raise towards 1024 on v6e
    tn_target=256,     # multiple of 128 (lane axis)
    tk_target=512,     # multiple of 128 (contraction tile)
    vmem_limit_bytes=64 * 1024 * 1024,
):
    """x: (M, H_in) f32; weights: (N, H_in, H_out) f32; biases: (N, 1, H_out) f32."""
    M, H_in = x.shape
    N, _, H_out = weights.shape
    out_dtype = x.dtype

    # Tile sizes: aligned to (8, 128) and capped at the padded array dims.
    tm = min(tm_target, _round_up(M, 8))
    tn = min(tn_target, _round_up(H_out, 128))
    tk = min(tk_target, _round_up(H_in, 128))

    # Pad to tile multiples (zeros in the contraction dim are harmless; padded
    # rows/cols are sliced off below).
    Mp = _round_up(M, tm)
    Hp = _round_up(H_out, tn)
    Kp = _round_up(H_in, tk)

    # bf16 MXU inputs, cast once here (not per-branch inside the loop).
    xp = jnp.pad(x.astype(jnp.bfloat16), ((0, Mp - M), (0, Kp - H_in)))
    wp = jnp.pad(
        weights.astype(jnp.bfloat16),
        ((0, 0), (0, Kp - H_in), (0, Hp - H_out)),
    )
    bp = jnp.pad(biases.astype(jnp.float32), ((0, 0), (0, 0), (0, Hp - H_out)))

    grid_m, grid_j, grid_k = Mp // tm, Hp // tn, Kp // tk
    grid = (grid_m, grid_j, N, grid_k)

    # Scheduler hint: total MXU flops + HBM traffic (weights re-streamed per
    # M-tile, x re-streamed per (H_out-tile, branch)).
    out_itemsize = jnp.dtype(out_dtype).itemsize
    cost = pl.CostEstimate(
        flops=int(2.0 * Mp * Kp * Hp * N),
        transcendentals=0,
        bytes_accessed=int(
            xp.nbytes * N * grid_j
            + wp.nbytes * grid_m
            + bp.nbytes * grid_m
            + Mp * Hp * out_itemsize
        ),
    )

    out = pl.pallas_call(
        reduce_mul_kernel,
        out_shape=jax.ShapeDtypeStruct((Mp, Hp), out_dtype),
        grid_spec=pltpu.PrefetchScalarGridSpec(
            num_scalar_prefetch=0,
            grid=grid,
            in_specs=[
                # x tile: varies with (i, k); re-used across j and branches.
                pl.BlockSpec((tm, tk), lambda i, j, n, k: (i, k)),
                # per-branch weight tile: the only per-step-varying big stream.
                pl.BlockSpec((None, tk, tn), lambda i, j, n, k: (n, k, j)),
                # per-branch bias tile (f32), constant across k.
                pl.BlockSpec((None, 1, tn), lambda i, j, n, k: (n, 0, j)),
            ],
            # Constant in (n, k) -> VMEM-resident output tile across both
            # reduction axes; written once at the final step.
            out_specs=pl.BlockSpec((tm, tn), lambda i, j, n, k: (i, j)),
            scratch_shapes=[
                pltpu.VMEM((tm, tn), jnp.float32),  # K accumulator (per branch)
                pltpu.VMEM((tm, tn), jnp.float32),  # running product over branches
            ],
        ),
        compiler_params=pltpu.CompilerParams(
            dimension_semantics=("parallel", "parallel", "arbitrary", "arbitrary"),
            vmem_limit_bytes=vmem_limit_bytes,
        ),
        cost_estimate=cost,
    )(xp, wp, bp)

    return out[:M, :H_out]


if __name__ == "__main__":
    # Small shapes consistent with the module's generic forward.
    batch, seq, hidden = 2, 8, 32
    n_branch = 3

    key = jax.random.PRNGKey(0)
    kx, kw, kb = jax.random.split(key, 3)

    x = jax.random.normal(kx, (batch, seq, hidden), dtype=jnp.float32)
    # Synthetic branch parameters (N, H_in, H_out) / (N, 1, H_out).
    weights = jax.random.normal(kw, (n_branch, hidden, hidden), dtype=jnp.float32) * 0.1
    biases = jax.random.normal(kb, (n_branch, 1, hidden), dtype=jnp.float32) * 0.1

    x2d = x.reshape(batch * seq, hidden)  # glue: flatten batch/seq outside kernel

    out = reduce_mul(x2d, weights, biases)
    out = jax.block_until_ready(out)

    # Pure-JAX reference of ReduceMul over the same branches, using the same
    # bf16 input quantization as the kernel but full-f32 math.
    xq = x2d.astype(jnp.bfloat16).astype(jnp.float32)
    wq = weights.astype(jnp.bfloat16).astype(jnp.float32)
    ref = None
    for i in range(n_branch):
        yi = jnp.dot(xq, wq[i], precision=lax.Precision.HIGHEST) + biases[i]
        ref = yi if ref is None else ref * yi
    assert jnp.allclose(out, ref, atol=1e-3, rtol=1e-3), "mismatch vs reference"

    out_full = out.reshape(batch, seq, hidden)
    assert out_full.shape == (batch, seq, hidden)

    print("KERNEL_OK")
</pallas_src>

<mosaic_0001>
module attributes {stable_mosaic.version = 11 : i64} {
  func.func @reduce_mul_kernel(%arg0: i32, %arg1: i32, %arg2: i32, %arg3: i32, %arg4: memref<16x128xbf16, #tpu.memory_space<vmem>>, %arg5: memref<1x128x128xbf16, #tpu.memory_space<vmem>>, %arg6: memref<1x1x128xf32, #tpu.memory_space<vmem>>, %arg7: memref<16x128xf32, #tpu.memory_space<vmem>>, %arg8: memref<16x128xf32, #tpu.memory_space<vmem>>, %arg9: memref<16x128xf32, #tpu.memory_space<vmem>>) attributes {dimension_semantics = [#tpu.dimension_semantics<parallel>, #tpu.dimension_semantics<parallel>, #tpu.dimension_semantics<arbitrary>, #tpu.dimension_semantics<arbitrary>], iteration_bounds = array<i64: 1, 1, 3, 1>, scalar_prefetch = 0 : i64, scratch_operands = 2 : i64, tpu.core_type = #tpu.core_type<tc>, window_params = [{transform_indices = @transform_0, window_bounds = array<i64: 16, 128>}, {transform_indices = @transform_1, window_bounds = array<i64: 1, 128, 128>}, {transform_indices = @transform_2, window_bounds = array<i64: 1, 1, 128>}, {transform_indices = @transform_3, window_bounds = array<i64: 16, 128>}]} {
    %c0_i32 = arith.constant 0 : i32
    %0 = arith.cmpi eq, %arg3, %c0_i32 : i32
    %1 = arith.extui %0 : i1 to i32
    %c0_i32_0 = arith.constant 0 : i32
    %2 = arith.cmpi ne, %1, %c0_i32_0 : i32
    scf.if %2 {
      %cst_15 = arith.constant 0.000000e+00 : f32
      %23 = vector.broadcast %cst_15 : f32 to vector<16x128xf32>
      %c0_16 = arith.constant 0 : index
      %c0_17 = arith.constant 0 : index
      %24 = vector.load %arg8[%c0_16, %c0_17] : memref<16x128xf32, #tpu.memory_space<vmem>>, vector<16x128xf32>
      tpu.vector_store %arg8[%c0_16, %c0_17], %23 {strides = array<i32>} : memref<16x128xf32, #tpu.memory_space<vmem>>, vector<16x128xf32>,
    } else {
    }
    %c0 = arith.constant 0 : index
    %c0_1 = arith.constant 0 : index
    %3 = vector.load %arg8[%c0, %c0_1] : memref<16x128xf32, #tpu.memory_space<vmem>>, vector<16x128xf32>
    %c0_2 = arith.constant 0 : index
    %c0_3 = arith.constant 0 : index
    %4 = vector.load %arg4[%c0_2, %c0_3] : memref<16x128xbf16, #tpu.memory_space<vmem>>, vector<16x128xbf16>
    %c0_4 = arith.constant 0 : index
    %c0_5 = arith.constant 0 : index
    %c0_6 = arith.constant 0 : index
    %5 = vector.load %arg5[%c0_4, %c0_5, %c0_6] : memref<1x128x128xbf16, #tpu.memory_space<vmem>>, vector<1x128x128xbf16>
    %6 = vector.shape_cast %5 : vector<1x128x128xbf16> to vector<128x128xbf16>
    %cst = arith.constant dense<0.000000e+00> : vector<16x128xf32>
    %7 = tpu.matmul %4, %6, %cst {dimension_numbers = #tpu.dot_dimension_numbers<[1], [0], [0], [1], [0, 0, 1, 1], [], []>} : vector<16x128xbf16>, vector<128x128xbf16>, vector<16x128xf32> -> vector<16x128xf32>
    %8 = arith.addf %3, %7 : vector<16x128xf32>
    %c0_7 = arith.constant 0 : index
    %c0_8 = arith.constant 0 : index
    %9 = vector.load %arg8[%c0_7, %c0_8] : memref<16x128xf32, #tpu.memory_space<vmem>>, vector<16x128xf32>
    tpu.vector_store %arg8[%c0_7, %c0_8], %8 {strides = array<i32>} : memref<16x128xf32, #tpu.memory_space<vmem>>, vector<16x128xf32>,
    %c0_i32_9 = arith.constant 0 : i32
    %10 = arith.cmpi eq, %arg3, %c0_i32_9 : i32
    %c0_i32_10 = arith.constant 0 : i32
    %11 = arith.cmpi eq, %arg2, %c0_i32_10 : i32
    %12 = arith.andi %10, %11 : i1
    %13 = arith.extui %12 : i1 to i32
    %c0_i32_11 = arith.constant 0 : i32
    %14 = arith.cmpi ne, %13, %c0_i32_11 : i32
    scf.if %14 {
      %c0_15 = arith.constant 0 : index
      %c0_16 = arith.constant 0 : index
      %23 = vector.load %arg8[%c0_15, %c0_16] : memref<16x128xf32, #tpu.memory_space<vmem>>, vector<16x128xf32>
      %c0_17 = arith.constant 0 : index
      %c0_18 = arith.constant 0 : index
      %c0_19 = arith.constant 0 : index
      %24 = vector.load %arg6[%c0_17, %c0_18, %c0_19] : memref<1x1x128xf32, #tpu.memory_space<vmem>>, vector<1x1x128xf32>
      %25 = vector.shape_cast %24 : vector<1x1x128xf32> to vector<1x128xf32>
      %26 = vector.broadcast %25 : vector<1x128xf32> to vector<16x128xf32>
      %27 = arith.addf %23, %26 : vector<16x128xf32>
      %c0_20 = arith.constant 0 : index
      %c0_21 = arith.constant 0 : index
      %28 = vector.load %arg9[%c0_20, %c0_21] : memref<16x128xf32, #tpu.memory_space<vmem>>, vector<16x128xf32>
      tpu.vector_store %arg9[%c0_20, %c0_21], %27 {strides = array<i32>} : memref<16x128xf32, #tpu.memory_space<vmem>>, vector<16x128xf32>,
    } else {
    }
    %c0_i32_12 = arith.constant 0 : i32
    %15 = arith.cmpi sgt, %arg2, %c0_i32_12 : i32
    %16 = arith.andi %10, %15 : i1
    %17 = arith.extui %16 : i1 to i32
    %c0_i32_13 = arith.constant 0 : i32
    %18 = arith.cmpi ne, %17, %c0_i32_13 : i32
    scf.if %18 {
      %c0_15 = arith.constant 0 : index
      %c0_16 = arith.constant 0 : index
      %23 = vector.load %arg9[%c0_15, %c0_16] : memref<16x128xf32, #tpu.memory_space<vmem>>, vector<16x128xf32>
      %c0_17 = arith.constant 0 : index
      %c0_18 = arith.constant 0 : index
      %24 = vector.load %arg8[%c0_17, %c0_18] : memref<16x128xf32, #tpu.memory_space<vmem>>, vector<16x128xf32>
      %c0_19 = arith.constant 0 : index
      %c0_20 = arith.constant 0 : index
      %c0_21 = arith.constant 0 : index
      %25 = vector.load %arg6[%c0_19, %c0_20, %c0_21] : memref<1x1x128xf32, #tpu.memory_space<vmem>>, vector<1x1x128xf32>
      %26 = vector.shape_cast %25 : vector<1x1x128xf32> to vector<1x128xf32>
      %27 = vector.broadcast %26 : vector<1x128xf32> to vector<16x128xf32>
      %28 = arith.addf %24, %27 : vector<16x128xf32>
      %29 = arith.mulf %23, %28 : vector<16x128xf32>
      %c0_22 = arith.constant 0 : index
      %c0_23 = arith.constant 0 : index
      %30 = vector.load %arg9[%c0_22, %c0_23] : memref<16x128xf32, #tpu.memory_space<vmem>>, vector<16x128xf32>
      tpu.vector_store %arg9[%c0_22, %c0_23], %29 {strides = array<i32>} : memref<16x128xf32, #tpu.memory_space<vmem>>, vector<16x128xf32>,
    } else {
    }
    %c2_i32 = arith.constant 2 : i32
    %19 = arith.cmpi eq, %arg2, %c2_i32 : i32
    %20 = arith.andi %10, %19 : i1
    %21 = arith.extui %20 : i1 to i32
    %c0_i32_14 = arith.constant 0 : i32
    %22 = arith.cmpi ne, %21, %c0_i32_14 : i32
    scf.if %22 {
      %c0_15 = arith.constant 0 : index
      %c0_16 = arith.constant 0 : index
      %23 = vector.load %arg9[%c0_15, %c0_16] : memref<16x128xf32, #tpu.memory_space<vmem>>, vector<16x128xf32>
      %c0_17 = arith.constant 0 : index
      %c0_18 = arith.constant 0 : index
      %24 = vector.load %arg7[%c0_17, %c0_18] : memref<16x128xf32, #tpu.memory_space<vmem>>, vector<16x128xf32>
      tpu.vector_store %arg7[%c0_17, %c0_18], %23 {strides = array<i32>} : memref<16x128xf32, #tpu.memory_space<vmem>>, vector<16x128xf32>,
    } else {
    }
    return
  }
  func.func @transform_0(%arg0: i32, %arg1: i32, %arg2: i32, %arg3: i32) -> (i32, i32) {
    %c0_i32 = arith.constant 0 : i32
    return %arg0, %arg3 : i32, i32
  }
  func.func @transform_1(%arg0: i32, %arg1: i32, %arg2: i32, %arg3: i32) -> (i32, i32, i32) {
    %c0_i32 = arith.constant 0 : i32
    return %arg2, %arg3, %arg1 : i32, i32, i32
  }
  func.func @transform_2(%arg0: i32, %arg1: i32, %arg2: i32, %arg3: i32) -> (i32, i32, i32) {
    %c0_i32 = arith.constant 0 : i32
    %c0_i32_0 = arith.constant 0 : i32
    return %arg2, %c0_i32, %arg1 : i32, i32, i32
  }
  func.func @transform_3(%arg0: i32, %arg1: i32, %arg2: i32, %arg3: i32) -> (i32, i32) {
    %c0_i32 = arith.constant 0 : i32
    return %arg0, %arg1 : i32, i32
  }
}

</mosaic_0001>

<llo_original>
// kernel: tpu_custom_call.1
$region0: #{tpu_custom_call.1}
  #allocation0 [shape = 'u32[]', space=smem, size = 0x4, offset = 0x4, fixed_abs, tag = 'smem constant byte address 0x4 - core index']
  #allocation1 [shape = 'u32[144,128]{1,0:T(1,128)}', space=vmem, size = 0x12000, scoped, tag = 'internal scratch']
  #allocation2 [shape = 'f32[16,128]{1,0:T(8,128)}', space=vmem, size = 0x2000, scoped, tag = 'scratch operand']
  #allocation3 [shape = 'f32[16,128]{1,0:T(8,128)}', space=vmem, size = 0x2000, scoped, tag = 'scratch operand']
  %s0 = inlined_call_operand.hbm [shape: bf16[16,128], index: 0, kind: input, shape index: {}]
  %s1 = inlined_call_operand.hbm [shape: bf16[3,128,128], index: 1, kind: input, shape index: {}]
  %s2 = inlined_call_operand.hbm [shape: f32[3,1,128], index: 2, kind: input, shape index: {}]
  %s3 = inlined_call_operand.hbm [shape: f32[16,128], index: 3, kind: output, shape index: {}]
  %s4 = sld [smem:[#allocation0]]
  $region73: #{tpu_custom_call.1} parent=0
    _
  %s6 = ssub.s32 1, %s4
  %s7 = scalar_select 0, %s6, %s4
  $region1: #{tpu_custom_call.1} parent=0
    #allocation4 [shape = 'u8[4096]{0}', space=vmem, size = 0x1000, scoped, tag = 'input window, operand 0, single buffered']
    #allocation5 [shape = 's32[2]{0}', space=sflag, size = 0x8, scoped, tag = 'scoped memory for tpu_custom_call.1']
    #allocation6 [shape = 's32[2]{0}', space=sflag, size = 0x8, scoped, tag = 'scoped memory for tpu_custom_call.1']
    #allocation7 [shape = 'u8[65536]{0}', space=vmem, size = 0x10000, scoped, tag = 'input window, operand 1']
    #allocation8 [shape = 's32[2]{0}', space=sflag, size = 0x8, scoped, tag = 'scoped memory for tpu_custom_call.1']
    #allocation9 [shape = 'u8[1024]{0}', space=vmem, size = 0x400, scoped, tag = 'input window, operand 2']
    #allocation10 [shape = 'u8[8192]{0}', space=vmem, size = 0x2000, scoped, tag = 'output window, operand 0, single buffered']
    %8 = vsyncpa [#allocation5], 0
    %9 = vsyncpa [#allocation8], 0
    %s10 = scalar_lea.sflag [#allocation8], 1
    %11 = vsyncpa %s10, 0
    %12 = vsyncpa [#allocation6], 0
    loop: start=0, step=1, limit=5
    $region2: #{tpu_custom_call.1} parent=1 // loop_pre_header
      _
    $region3: #{tpu_custom_call.1} parent=1 // loop_header
      %s14 = sphi 0, %s18
      %p15 = scmp.ge.s32.totalorder %s14, 5
      %s21 = sphi 0, %s47
      %s22 = sphi 0, %s43
      %s23 = sphi 0, %s39
      %s24 = sphi 0, %s35
      %s25 = sphi 0, %s21
      %s26 = sphi 0, %s22
      %s27 = sphi 0, %s23
      %s28 = sphi 0, %s24
      %s29 = sphi 0, %s25
      %s30 = sphi 0, %s26
      %s31 = sphi 0, %s27
      %s32 = sphi 0, %s28
      %s52 = sphi 0, %s54
      %s55 = sphi 0, %s52
      %s56 = sphi 0, %s55
      %s72 = sphi 0, %s56
      %s82 = sphi 0, %s84
      %s85 = sphi 0, %s82
      %s86 = sphi 0, %s85
      %s102 = sphi 0, %s86
      %s110 = sphi 0, %s112
      %s113 = sphi 0, %s110
      %s114 = sphi 0, %s113
      %s130 = sphi 0, %s114
      %s138 = sphi 0, %s140
      %s141 = sphi 0, %s138
      %s142 = sphi 0, %s141
      %s158 = sphi 0, %s142
    $region4: #{tpu_custom_call.1} parent=1 // loop_header_branch
      %17 = sbr.rel (%p15) target = $region8
    $region5: #{tpu_custom_call.1} parent=1 // loop_body
      %s19 = ssub.s32 %s14, 1
      %s20 = ssub.s32 %s14, 2
      %s33 = sadd.s32 1, %s24
      %p34 = scmp.ge.s32.totalorder %s33, 1
      %s35 = scalar_select %p34, 0, %s33
      %s36 = sadd.s32 1, %s23
      %s37 = scalar_select %p34, %s36, %s23
      %p38 = scmp.ge.s32.totalorder %s37, 3
      %s39 = scalar_select %p38, 0, %s37
      %s40 = sadd.s32 1, %s22
      %s41 = scalar_select %p38, %s40, %s22
      %p42 = scmp.ge.s32.totalorder %s41, 1
      %s43 = scalar_select %p42, 0, %s41
      %s44 = sadd.s32 1, %s21
      %s45 = scalar_select %p42, %s44, %s21
      %p46 = scmp.ge.s32.totalorder %s45, 1
      %s47 = scalar_select %p46, 0, %s45
      %s48 = ssub.s32 %s21, %s47
      %s49 = ssub.s32 %s24, %s35
      %s50 = sor.u32 %s48, %s49
      %p51 = scmp.eq.s32.totalorder %s50, 0
      %s53 = sadd.s32 %s52, 1
      %s54 = scalar_select %p51, %s52, %s53
      %p57 = pneg %p51
      %p58 = scmp.eq.s32.totalorder %s14, 2
      %p59 = por %p57, %p58
      %p60 = scmp.ne.s32.totalorder %s52, %s55
      %p61 = scmp.eq.s32.totalorder %s14, 0
      %p62 = por %p60, %p61
      %p63 = scmp.ne.s32.totalorder %s52, %s55
      %p64 = scmp.eq.s32.totalorder %s19, 2
      %p65 = por %p63, %p64
      %p66 = scmp.ne.s32.totalorder %s55, %s56
      %p67 = scmp.eq.s32.totalorder %s19, 0
      %p68 = por %p66, %p67
      %p69 = scmp.ne.s32.totalorder %s55, %s56
      %p70 = scmp.eq.s32.totalorder %s20, 2
      %p71 = por %p69, %p70
      %p73 = scmp.ne.s32.totalorder %s56, %s72
      %p74 = scmp.eq.s32.totalorder %s20, 0
      %p75 = por %p73, %p74
      %s76 = ssub.s32 %s23, %s39
      %s77 = ssub.s32 %s24, %s35
      %s78 = sor.u32 %s76, %s77
      %s79 = ssub.s32 %s22, %s43
      %s80 = sor.u32 %s78, %s79
      %p81 = scmp.eq.s32.totalorder %s80, 0
      %s83 = sadd.s32 %s82, 1
      %s84 = scalar_select %p81, %s82, %s83
      %p87 = pneg %p81
      %p88 = scmp.eq.s32.totalorder %s14, 2
      %p89 = por %p87, %p88
      %p90 = scmp.ne.s32.totalorder %s82, %s85
      %p91 = scmp.eq.s32.totalorder %s14, 0
      %p92 = por %p90, %p91
      %p93 = scmp.ne.s32.totalorder %s82, %s85
      %p94 = scmp.eq.s32.totalorder %s19, 2
      %p95 = por %p93, %p94
      %p96 = scmp.ne.s32.totalorder %s85, %s86
      %p97 = scmp.eq.s32.totalorder %s19, 0
      %p98 = por %p96, %p97
      %p99 = scmp.ne.s32.totalorder %s85, %s86
      %p100 = scmp.eq.s32.totalorder %s20, 2
      %p101 = por %p99, %p100
      %p103 = scmp.ne.s32.totalorder %s86, %s102
      %p104 = scmp.eq.s32.totalorder %s20, 0
      %p105 = por %p103, %p104
      %s106 = ssub.s32 %s23, %s39
      %s107 = ssub.s32 %s22, %s43
      %s108 = sor.u32 %s106, %s107
      %p109 = scmp.eq.s32.totalorder %s108, 0
      %s111 = sadd.s32 %s110, 1
      %s112 = scalar_select %p109, %s110, %s111
      %p115 = pneg %p109
      %p116 = scmp.eq.s32.totalorder %s14, 2
      %p117 = por %p115, %p116
      %p118 = scmp.ne.s32.totalorder %s110, %s113
      %p119 = scmp.eq.s32.totalorder %s14, 0
      %p120 = por %p118, %p119
      %p121 = scmp.ne.s32.totalorder %s110, %s113
      %p122 = scmp.eq.s32.totalorder %s19, 2
      %p123 = por %p121, %p122
      %p124 = scmp.ne.s32.totalorder %s113, %s114
      %p125 = scmp.eq.s32.totalorder %s19, 0
      %p126 = por %p124, %p125
      %p127 = scmp.ne.s32.totalorder %s113, %s114
      %p128 = scmp.eq.s32.totalorder %s20, 2
      %p129 = por %p127, %p128
      %p131 = scmp.ne.s32.totalorder %s114, %s130
      %p132 = scmp.eq.s32.totalorder %s20, 0
      %p133 = por %p131, %p132
      %s134 = ssub.s32 %s21, %s47
      %s135 = ssub.s32 %s22, %s43
      %s136 = sor.u32 %s134, %s135
      %p137 = scmp.eq.s32.totalorder %s136, 0
      %s139 = sadd.s32 %s138, 1
      %s140 = scalar_select %p137, %s138, %s139
      %p143 = pneg %p137
      %p144 = scmp.eq.s32.totalorder %s14, 2
      %p145 = por %p143, %p144
      %p146 = scmp.ne.s32.totalorder %s138, %s141
      %p147 = scmp.eq.s32.totalorder %s14, 0
      %p148 = por %p146, %p147
      %p149 = scmp.ne.s32.totalorder %s138, %s141
      %p150 = scmp.eq.s32.totalorder %s19, 2
      %p151 = por %p149, %p150
      %p152 = scmp.ne.s32.totalorder %s141, %s142
      %p153 = scmp.eq.s32.totalorder %s19, 0
      %p154 = por %p152, %p153
      %p155 = scmp.ne.s32.totalorder %s141, %s142
      %p156 = scmp.eq.s32.totalorder %s20, 2
      %p157 = por %p155, %p156
      %p159 = scmp.ne.s32.totalorder %s142, %s158
      %p160 = scmp.eq.s32.totalorder %s20, 0
      %p161 = por %p159, %p160
      %p162 = scmp.le.s32.totalorder 1, %s14
      %p163 = scmp.lt.s32.totalorder %s14, 4
      %p164 = pnand %p162, %p163
      %p165 = pneg %p164
      // Predicated region
      $region9: #{tpu_custom_call.1} parent=5 // pred_check
        _
      $region10: #{tpu_custom_call.1} parent=5 // pred_check_branch
        %167 = sbr.rel (%p164) target = $region12
      $region11: #{tpu_custom_call.1} parent=5 // pred_region
        %s168 = ssub.s32 %s14, 1
        // Predicated region
        $region13: #{tpu_custom_call.1} parent=11 // pred_check
          %p169 = pneg %p68
        $region14: #{tpu_custom_call.1} parent=11 // pred_check_branch
          %171 = sbr.rel (%p169) target = $region16
        $region15: #{tpu_custom_call.1} parent=11 // pred_region
          %s172 = smul.u32 2, %s25
          %s174 = ssub.s32 128, 128
          %175 = vsyncadd [#allocation5], %s174
          %s176 = sadd.s32 %s28, %s172
          %s177 = smul.addr %s176, 64
          %s178 = scalar_lea.hbm %s0, %s177
          %s179 = sshll.u32 [#allocation4], 4
          %s180 = int_to_ptr.vmem [resolvable:$true] %s179
          %185 = dma.hbm_to_vmem [thread:$0]  %s178, 128, %s180, [#allocation5], 64, 64, 4
        $region16: #{tpu_custom_call.1} parent=11 // pred_fallthru
          _
      $region12: #{tpu_custom_call.1} parent=5 // pred_fallthru
        _
      %p186 = scmp.lt.s32.totalorder %s14, 3
      // Predicated region
      $region17: #{tpu_custom_call.1} parent=5 // pred_check
        %p187 = pneg %p186
      $region18: #{tpu_custom_call.1} parent=5 // pred_check_branch
        %189 = sbr.rel (%p187) target = $region20
      $region19: #{tpu_custom_call.1} parent=5 // pred_region
        // Predicated region
        $region21: #{tpu_custom_call.1} parent=19 // pred_check
          %p190 = pneg %p92
        $region22: #{tpu_custom_call.1} parent=19 // pred_check_branch
          %192 = sbr.rel (%p190) target = $region24
        $region23: #{tpu_custom_call.1} parent=19 // pred_region
          %s193 = sand.u32 %s14, 1
          %s194 = scalar_lea.sflag [#allocation8], %s193
          %s195 = sand.u32 %s82, 1
          %s196 = smul.addr %s195, 64
          %s197 = scalar_lea.vmem [#allocation7], %s196
          %s198 = smul.u32 16, %s24
          %s200 = ssub.s32 1024, 1024
          %201 = vsyncadd %s194, %s200
          %s202 = sadd.s32 %s22, %s198
          %s203 = smul.addr %s23, 16
          %s204 = sadd.s32 %s202, %s203
          %s205 = smul.addr %s204, 64
          %s206 = scalar_lea.hbm %s1, %s205
          %s207 = sshll.u32 %s197, 4
          %s208 = int_to_ptr.vmem [resolvable:$true] %s207
          %213 = dma.hbm_to_vmem [thread:$0]  %s206, 1024, %s208, %s194, 64, 64, 4
        $region24: #{tpu_custom_call.1} parent=19 // pred_fallthru
          _
        // Predicated region
        $region25: #{tpu_custom_call.1} parent=19 // pred_check
          %p214 = pneg %p120
        $region26: #{tpu_custom_call.1} parent=19 // pred_check_branch
          %216 = sbr.rel (%p214) target = $region28
        $region27: #{tpu_custom_call.1} parent=19 // pred_region
          %s217 = sand.u32 %s14, 1
          %s218 = scalar_lea.sflag [#allocation8], %s217
          %s219 = sand.u32 %s110, 1
          %s220 = scalar_lea.vmem [#allocation9], %s219
          %s222 = ssub.s32 16, 16
          %223 = vsyncadd %s218, %s222
          %s224 = sadd.s32 %s22, %s23
          %s225 = smul.addr %s224, 16
          %s226 = scalar_lea.hbm %s2, %s225
          %s228 = sshll.u32 %s220, 4
          %s229 = int_to_ptr.vmem [resolvable:$true] %s228
          %231 = dma.hbm_to_vmem [thread:$0]  %s226, 16, %s229, %s218
        $region28: #{tpu_custom_call.1} parent=19 // pred_fallthru
          _
      $region20: #{tpu_custom_call.1} parent=5 // pred_fallthru
        _
      %p232 = scmp.le.s32.totalorder 1, %s14
      %p233 = scmp.lt.s32.totalorder %s14, 4
      %p234 = pnand %p232, %p233
      %p235 = pneg %p234
      // Predicated region
      $region29: #{tpu_custom_call.1} parent=5 // pred_check
        _
      $region30: #{tpu_custom_call.1} parent=5 // pred_check_branch
        %237 = sbr.rel (%p234) target = $region32
      $region31: #{tpu_custom_call.1} parent=5 // pred_region
        %s238 = ssub.s32 %s14, 1
        // Predicated region
        $region33: #{tpu_custom_call.1} parent=31 // pred_check
          %p239 = pneg %p68
        $region34: #{tpu_custom_call.1} parent=31 // pred_check_branch
          %241 = sbr.rel (%p239) target = $region36
        $region35: #{tpu_custom_call.1} parent=31 // pred_region
          %242 = dma.done [#allocation5], 128
        $region36: #{tpu_custom_call.1} parent=31 // pred_fallthru
          _
        %s243 = sand.u32 %s19, 1
        %s244 = scalar_lea.sflag [#allocation8], %s243
        %s245 = sand.u32 %s85, 1
        %s246 = smul.addr %s245, 64
        %s247 = scalar_lea.vmem [#allocation7], %s246
        // Predicated region
        $region37: #{tpu_custom_call.1} parent=31 // pred_check
          %p248 = pneg %p98
        $region38: #{tpu_custom_call.1} parent=31 // pred_check_branch
          %250 = sbr.rel (%p248) target = $region40
        $region39: #{tpu_custom_call.1} parent=31 // pred_region
          %251 = dma.done %s244, 1024
        $region40: #{tpu_custom_call.1} parent=31 // pred_fallthru
          _
        %s252 = sand.u32 %s19, 1
        %s253 = scalar_lea.sflag [#allocation8], %s252
        %s254 = sand.u32 %s113, 1
        %s255 = scalar_lea.vmem [#allocation9], %s254
        // Predicated region
        $region41: #{tpu_custom_call.1} parent=31 // pred_check
          %p256 = pneg %p126
        $region42: #{tpu_custom_call.1} parent=31 // pred_check_branch
          %258 = sbr.rel (%p256) target = $region44
        $region43: #{tpu_custom_call.1} parent=31 // pred_region
          %259 = dma.done %s253, 16
        $region44: #{tpu_custom_call.1} parent=31 // pred_fallthru
          _
        %p260 = pneg %p68
        %p261 = pneg %p65
        %s262 = sand.u32 %s19, 1
        %s263 = scalar_lea.sflag [#allocation8], %s262
        %s264 = sand.u32 %s85, 1
        %s265 = smul.addr %s264, 64
        %s266 = scalar_lea.vmem [#allocation7], %s265
        %p267 = pneg %p98
        %p268 = pneg %p95
        %s269 = sand.u32 %s19, 1
        %s270 = scalar_lea.sflag [#allocation8], %s269
        %s271 = sand.u32 %s113, 1
        %s272 = scalar_lea.vmem [#allocation9], %s271
        %p273 = pneg %p126
        %p274 = pneg %p123
        %p275 = pneg %p154
        %p276 = pneg %p151
        %s277 = smul.u32 2, %s25
        %s278 = smul.u32 16, %s28
        %s279 = smul.u32 2, %s25
        %p281 = scmp.eq.s32.totalorder %s28, 0
        // Predicated region
        $region45: #{tpu_custom_call.1} parent=31 // pred_check
          %p282 = pneg %p281
        $region46: #{tpu_custom_call.1} parent=31 // pred_check_branch
          %284 = sbr.rel (%p282) target = $region48
        $region47: #{tpu_custom_call.1} parent=31 // pred_region
          %285 = vst [vmem:[#allocation2] sm:$0xff] 0.0
          %286 = vst [vmem:[#allocation2 + $0x8] sm:$0xff] 0.0
        $region48: #{tpu_custom_call.1} parent=31 // pred_fallthru
          _
        %v287 = vld [vmem:[#allocation2] sm:$0xff]
        %v288 = vld [vmem:[#allocation2 + $0x8] sm:$0xff]
        %v289 = vld [vmem:[#allocation4] sm:$0xf]
        %v290 = vld [vmem:[#allocation4 + $0x4] sm:$0xf]
        %v291 = vld [vmem:[%s247] sm:$0xf]
        %v292 = vld [vmem:[%s247 + $0x4] sm:$0xf]
        %v293 = vld [vmem:[%s247 + $0x8] sm:$0xf]
        %v294 = vld [vmem:[%s247 + $0xc] sm:$0xf]
        %v295 = vld [vmem:[%s247 + $0x10] sm:$0xf]
        %v296 = vld [vmem:[%s247 + $0x14] sm:$0xf]
        %v297 = vld [vmem:[%s247 + $0x18] sm:$0xf]
        %v298 = vld [vmem:[%s247 + $0x1c] sm:$0xf]
        %v299 = vld [vmem:[%s247 + $0x20] sm:$0xf]
        %v300 = vld [vmem:[%s247 + $0x24] sm:$0xf]
        %v301 = vld [vmem:[%s247 + $0x28] sm:$0xf]
        %v302 = vld [vmem:[%s247 + $0x2c] sm:$0xf]
        %v303 = vld [vmem:[%s247 + $0x30] sm:$0xf]
        %v304 = vld [vmem:[%s247 + $0x34] sm:$0xf]
        %v305 = vld [vmem:[%s247 + $0x38] sm:$0xf]
        %v306 = vld [vmem:[%s247 + $0x3c] sm:$0xf]
        %v309 = vunpack.c.l.b16 %v289
        %v310 = vunpack.c.l.b16 %v290
        %v311 = vpack.c.b16 %v310, %v309
        %v329 = vunpack.c.l.b16 %v291
        %v330 = vunpack.c.l.b16 %v292
        %v331 = vunpack.c.l.b16 %v293
        %v332 = vunpack.c.l.b16 %v294
        %v333 = vunpack.c.l.b16 %v295
        %v334 = vunpack.c.l.b16 %v296
        %v335 = vunpack.c.l.b16 %v297
        %v336 = vunpack.c.l.b16 %v298
        %v337 = vunpack.c.l.b16 %v299
        %v338 = vunpack.c.l.b16 %v300
        %v339 = vunpack.c.l.b16 %v301
        %v340 = vunpack.c.l.b16 %v302
        %v341 = vunpack.c.l.b16 %v303
        %v342 = vunpack.c.l.b16 %v304
        %v343 = vunpack.c.l.b16 %v305
        %v344 = vunpack.c.l.b16 %v306
        %v345 = vpack.c.b16 %v330, %v329
        %v346 = vpack.c.b16 %v332, %v331
        %v347 = vpack.c.b16 %v334, %v333
        %v348 = vpack.c.b16 %v336, %v335
        %v349 = vpack.c.b16 %v338, %v337
        %v350 = vpack.c.b16 %v340, %v339
        %v351 = vpack.c.b16 %v342, %v341
        %v352 = vpack.c.b16 %v344, %v343
        %361 = vmatprep.subr.bf16.mxu0 0
        %362 = vmatpush1.bf16.msra.mxu0 %v345
        %363 = vmatprep.subr.bf16.mxu0 0
        %364 = vmatpush1.bf16.msra.mxu0 %v346
        %365 = vmatprep.subr.bf16.mxu0 0
        %366 = vmatpush1.bf16.msra.mxu0 %v347
        %367 = vmatprep.subr.bf16.mxu0 0
        %368 = vmatpush1.bf16.msra.mxu0 %v348
        %369 = vmatprep.subr.bf16.mxu0 0
        %370 = vmatpush1.bf16.msra.mxu0 %v349
        %371 = vmatprep.subr.bf16.mxu0 0
        %372 = vmatpush1.bf16.msra.mxu0 %v350
        %373 = vmatprep.subr.bf16.mxu0 0
        %374 = vmatpush1.bf16.msra.mxu0 %v351
        %375 = vmatprep.subr.bf16.mxu0 0
        %376 = vmatpush1.bf16.msra.mxu0 %v352
        %377 = vmatprep.subr.bf16.mxu0 0
        %378 = vmatpush1.bf16.msra.mxu0 0
        %379 = vmatprep.subr.bf16.mxu0 0
        %380 = vmatpush1.bf16.msra.mxu0 0
        %381 = vmatprep.subr.bf16.mxu0 0
        %382 = vmatpush1.bf16.msra.mxu0 0
        %383 = vmatprep.subr.bf16.mxu0 0
        %384 = vmatpush1.bf16.msra.mxu0 0
        %385 = vmatprep.subr.bf16.mxu0 0
        %386 = vmatpush1.bf16.msra.mxu0 0
        %387 = vmatprep.subr.bf16.mxu0 0
        %388 = vmatpush1.bf16.msra.mxu0 0
        %389 = vmatprep.subr.bf16.mxu0 0
        %390 = vmatpush1.bf16.msra.mxu0 0
        %391 = vmatprep.subr.bf16.mxu0 0
        %392 = vmatpush1.bf16.msra.mxu0 0
        %393 = vmatprep.mubr.bf16.mxu0 0
        %394 = vmatmul.mubr.bf16.gmra.mrb[0].mxu0 %v311
        %v395 = vpop.f32.mrb[0].mxu0
        %v396 = vadd.f32 0.0, %v395
        %v397 = vpop.f32.mrb[0].mxu0
        %v398 = vpop.f32.mrb[0].mxu0
        %v399 = vadd.f32 0.0, %v398
        %v400 = vpop.f32.mrb[0].mxu0
        %401 = vdwg.mxu0
        %v402 = vadd.f32 %v287, %v396
        %v403 = vadd.f32 %v288, %v399
        %404 = vst [vmem:[#allocation2] sm:$0xff] %v402
        %405 = vst [vmem:[#allocation2 + $0x8] sm:$0xff] %v403
        %p406 = scmp.eq.s32.totalorder %s27, 0
        %p407 = pnand %p281, %p406
        %p408 = pneg %p407
        // Predicated region
        $region49: #{tpu_custom_call.1} parent=31 // pred_check
          _
        $region50: #{tpu_custom_call.1} parent=31 // pred_check_branch
          %410 = sbr.rel (%p407) target = $region52
        $region51: #{tpu_custom_call.1} parent=31 // pred_region
          %v411 = vld [vmem:[#allocation2] sm:$0xff]
          %v412 = vld [vmem:[#allocation2 + $0x8] sm:$0xff]
          %v413 = vld [vmem:[%s255] sm:$0x1]
          %v415 = vlaneseq
          %v416 = vshrl.u32 %v415, 7
          %v417 = vsub.s32 0, %v416
          %v418 = vrot.slane %v413, %v417
          %v420 = vadd.f32 %v411, %v418
          %v421 = vadd.f32 %v412, %v418
          %422 = vst [vmem:[#allocation3] sm:$0xff] %v420
          %423 = vst [vmem:[#allocation3 + $0x8] sm:$0xff] %v421
        $region52: #{tpu_custom_call.1} parent=31 // pred_fallthru
          _
        %p424 = scmp.gt.s32.totalorder %s27, 0
        %p425 = pnand %p281, %p424
        %p426 = pneg %p425
        // Predicated region
        $region53: #{tpu_custom_call.1} parent=31 // pred_check
          _
        $region54: #{tpu_custom_call.1} parent=31 // pred_check_branch
          %428 = sbr.rel (%p425) target = $region56
        $region55: #{tpu_custom_call.1} parent=31 // pred_region
          %v429 = vld [vmem:[#allocation3] sm:$0xff]
          %v430 = vld [vmem:[#allocation3 + $0x8] sm:$0xff]
          %v431 = vld [vmem:[#allocation2] sm:$0xff]
          %v432 = vld [vmem:[#allocation2 + $0x8] sm:$0xff]
          %v433 = vld [vmem:[%s255] sm:$0x1]
          %v435 = vlaneseq
          %v436 = vshrl.u32 %v435, 7
          %v437 = vsub.s32 0, %v436
          %v438 = vrot.slane %v433, %v437
          %v440 = vadd.f32 %v431, %v438
          %v441 = vadd.f32 %v432, %v438
          %v442 = vmul.f32 %v429, %v440
          %v443 = vmul.f32 %v430, %v441
          %444 = vst [vmem:[#allocation3] sm:$0xff] %v442
          %445 = vst [vmem:[#allocation3 + $0x8] sm:$0xff] %v443
        $region56: #{tpu_custom_call.1} parent=31 // pred_fallthru
          _
        %p446 = scmp.eq.s32.totalorder %s27, 2
        %p447 = pnand %p281, %p446
        %p448 = pneg %p447
        // Predicated region
        $region57: #{tpu_custom_call.1} parent=31 // pred_check
          _
        $region58: #{tpu_custom_call.1} parent=31 // pred_check_branch
          %450 = sbr.rel (%p447) target = $region60
        $region59: #{tpu_custom_call.1} parent=31 // pred_region
          %v451 = vld [vmem:[#allocation3] sm:$0xff]
          %v452 = vld [vmem:[#allocation3 + $0x8] sm:$0xff]
          %453 = vst [vmem:[#allocation10] sm:$0xff] %v451
          %454 = vst [vmem:[#allocation10 + $0x8] sm:$0xff] %v452
        $region60: #{tpu_custom_call.1} parent=31 // pred_fallthru
          _
        // Predicated region
        $region61: #{tpu_custom_call.1} parent=31 // pred_check
          %p455 = pneg %p151
        $region62: #{tpu_custom_call.1} parent=31 // pred_check_branch
          %457 = sbr.rel (%p455) target = $region64
        $region63: #{tpu_custom_call.1} parent=31 // pred_region
          %s458 = smul.u32 2, %s25
          %s460 = ssub.s32 256, 256
          %461 = vsyncadd [#allocation6], %s460
          %s462 = sadd.s32 %s26, %s458
          %s463 = smul.addr %s462, 128
          %s464 = scalar_lea.hbm %s3, %s463
          %s465 = sshll.u32 [#allocation10], 4
          %s466 = int_to_ptr.vmem [resolvable:$true] %s465
          %471 = dma.vmem_to_hbm [thread:$0]  %s466, 256, %s464, [#allocation6], 128, 128, 8
        $region64: #{tpu_custom_call.1} parent=31 // pred_fallthru
          _
        // Predicated region
        $region65: #{tpu_custom_call.1} parent=31 // pred_check
          %p472 = pneg %p151
        $region66: #{tpu_custom_call.1} parent=31 // pred_check_branch
          %474 = sbr.rel (%p472) target = $region68
        $region67: #{tpu_custom_call.1} parent=31 // pred_region
          %475 = dma.done [#allocation6], 256
        $region68: #{tpu_custom_call.1} parent=31 // pred_fallthru
          _
      $region32: #{tpu_custom_call.1} parent=5 // pred_fallthru
        _
      %p476 = scmp.le.s32.totalorder 2, %s14
      // Predicated region
      $region69: #{tpu_custom_call.1} parent=5 // pred_check
        %p477 = pneg %p476
      $region70: #{tpu_custom_call.1} parent=5 // pred_check_branch
        %479 = sbr.rel (%p477) target = $region72
      $region71: #{tpu_custom_call.1} parent=5 // pred_region
        %s480 = ssub.s32 %s14, 2
      $region72: #{tpu_custom_call.1} parent=5 // pred_fallthru
        _
    $region6: #{tpu_custom_call.1} parent=1 // loop_footer
      %s18 = sadd.s32 1, %s14
    $region7: #{tpu_custom_call.1} parent=1 // loop_footer_branch
      %13 = sbr.rel target = $region3
    $region8: #{tpu_custom_call.1} parent=1 // loop_exit
      _
    %481 = vsyncpa [#allocation5], 1
    %s482 = scalar_lea.sflag [#allocation5], 1
    %483 = vsyncpa %s482, 1
    %484 = vsyncpa [#allocation8], 1
    %s485 = scalar_lea.sflag [#allocation8], 1
    %486 = vsyncpa %s485, 1
    %487 = vsyncpa [#allocation6], 1
    %s488 = scalar_lea.sflag [#allocation6], 1
    %489 = vsyncpa %s488, 1

</llo_original>
